<compile_context>
chip_gen: v7x
topology: tpu7x:2x2x1
jax: 0.10.0
libtpu: 0.0.40
codegen_flags: <defaults>
</compile_context>

<pallas_src>
import jax
import jax.numpy as jnp
from jax.experimental import pallas as pl
from jax.experimental.pallas import tpu as pltpu

_LANE = 128
_SUBLANE = 8


def _round_up(v: int, m: int) -> int:
    return ((v + m - 1) // m) * m


def ensemble_kernel(x_ref, w_ref, b_ref, o_ref, acc_ref):
    # x_ref:   (tb, H, C) VMEM   -- native-layout batch tile
    # w_ref:   (1, H)     SMEM   -- exp(weight) / H  (mean folded into the scale)
    # b_ref:   (1, C)     VMEM
    # o_ref:   (tb, C)    VMEM
    # acc_ref: (tb, C)    VMEM f32 scratch accumulator
    H = x_ref.shape[1]
    # Bias folded into the first term; static unrolled loop over the (small) head count.
    acc_ref[...] = (x_ref[:, 0, :].astype(jnp.float32) * w_ref[0, 0]
                    + b_ref[...].astype(jnp.float32))
    for h in range(1, H):
        acc_ref[...] += x_ref[:, h, :].astype(jnp.float32) * w_ref[0, h]
    o_ref[...] = acc_ref[...].astype(o_ref.dtype)


def geometric_weighted_ensemble(x, weight, bias, *, vmem_budget_bytes=32 * 1024 * 1024):
    """x: (B, H, C); weight: (1, H, 1); bias: (1, C) -> (B, C)."""
    B, H, C = x.shape
    out_dtype = x.dtype
    x_isz = x.dtype.itemsize
    o_isz = jnp.dtype(out_dtype).itemsize

    # Honest per-batch-row VMEM accounting. VMEM pads the last two dims of each block to
    # (sublane_tile, 128); double-buffered x & out blocks + f32 scratch + one f32 temp.
    Cp = _round_up(C, _LANE)
    Hp = _round_up(H, 8 * (4 // x_isz))            # sublane tile: 8 f32 / 16 bf16 / 32 i8
    x_row = Hp * Cp * x_isz
    o_row = Cp * o_isz
    f32_row = Cp * 4
    bytes_per_row = 2 * (x_row + o_row) + 2 * f32_row

    tb = max(_SUBLANE, (vmem_budget_bytes // bytes_per_row) // _SUBLANE * _SUBLANE)
    tb = min(tb, _round_up(B, _SUBLANE))
    # v7x megacore: if everything fit in one step but B is big enough to split, use 2 steps.
    if (B + tb - 1) // tb == 1 and B > 2 * _SUBLANE:
        tb = _round_up((B + 1) // 2, _SUBLANE)
    grid = ((B + tb - 1) // tb,)

    # Hoisted scalar prep: exp(weight) / H folds the mean into the per-head scale (H scalars).
    w_scaled = jnp.exp(weight.reshape(1, H).astype(jnp.float32)) / H

    out = pl.pallas_call(
        ensemble_kernel,
        out_shape=jax.ShapeDtypeStruct((B, C), out_dtype),
        grid=grid,
        in_specs=[
            pl.BlockSpec((tb, H, C), lambda i: (i, 0, 0)),        # pipelined native-layout tiles
            pl.BlockSpec(memory_space=pltpu.MemorySpace.SMEM),    # per-head scalars
            pl.BlockSpec((1, C), lambda i: (0, 0)),               # bias, same block every step
        ],
        out_specs=pl.BlockSpec((tb, C), lambda i: (i, 0)),
        scratch_shapes=[pltpu.VMEM((tb, C), jnp.float32)],
        compiler_params=pltpu.CompilerParams(
            dimension_semantics=("parallel",),                    # 2 TCs on v7x take halves
            vmem_limit_bytes=int(vmem_budget_bytes * 3 // 2),
        ),
        cost_estimate=pl.CostEstimate(
            flops=2 * B * H * C + B * C,
            transcendentals=0,
            bytes_accessed=B * H * C * x_isz + B * C * o_isz
                           + C * bias.dtype.itemsize + H * 4,
        ),
    )(x, w_scaled, bias)
    return out


def reference(x, weight, bias):
    return jnp.mean(x * jnp.exp(weight), axis=1) + bias


if __name__ == "__main__":
    B, H, C = 8, 4, 32  # batch, num_heads, num_classes

    key = jax.random.PRNGKey(0)
    kx, kw = jax.random.split(key)

    # synthetic per-head logits
    x = jax.random.normal(kx, (B, H, C), dtype=jnp.float32)

    # deterministic parameter init mirroring __init__:
    #   weight ~ N(0, 0.01), shape (1, H, 1); bias = zeros, shape (1, C)
    weight = 0.01 * jax.random.normal(kw, (1, H, 1), dtype=jnp.float32)
    bias = jnp.zeros((1, C), dtype=jnp.float32)

    out = geometric_weighted_ensemble(x, weight, bias)
    out = jax.block_until_ready(out)

    ref = reference(x, weight, bias)
    assert out.shape == (B, C)
    assert jnp.allclose(out, ref, rtol=1e-5, atol=1e-5), "mismatch vs reference"

    print("KERNEL_OK")
</pallas_src>

<mosaic_0001>
module attributes {stable_mosaic.version = 11 : i64} {
  func.func @ensemble_kernel(%arg0: i32, %arg1: memref<8x4x32xf32, #tpu.memory_space<vmem>>, %arg2: memref<1x4xf32, #tpu.memory_space<smem>>, %arg3: memref<1x32xf32, #tpu.memory_space<vmem>>, %arg4: memref<8x32xf32, #tpu.memory_space<vmem>>, %arg5: memref<8x32xf32, #tpu.memory_space<vmem>>) attributes {dimension_semantics = [#tpu.dimension_semantics<parallel>], iteration_bounds = array<i64: 1>, scalar_prefetch = 0 : i64, scratch_operands = 1 : i64, tpu.core_type = #tpu.core_type<tc>, window_params = [{transform_indices = @transform_0, window_bounds = array<i64: 8, 4, 32>}, {transform_indices = @transform_1, window_bounds = array<i64: 1, 4>}, {pipeline_mode = #tpu.pipeline_mode<synchronous>, transform_indices = @transform_2, window_bounds = array<i64: 1, 32>}, {transform_indices = @transform_3, window_bounds = array<i64: 8, 32>}]} {
    %c0 = arith.constant 0 : index
    %c0_0 = arith.constant 0 : index
    %c0_1 = arith.constant 0 : index
    %0 = vector.load %arg1[%c0, %c0_0, %c0_1] : memref<8x4x32xf32, #tpu.memory_space<vmem>>, vector<8x1x32xf32>
    %1 = vector.shape_cast %0 : vector<8x1x32xf32> to vector<8x32xf32>
    %c0_2 = arith.constant 0 : index
    %c0_3 = arith.constant 0 : index
    %2 = memref.load %arg2[%c0_2, %c0_3] : memref<1x4xf32, #tpu.memory_space<smem>>
    %3 = vector.broadcast %2 : f32 to vector<8x32xf32>
    %4 = arith.mulf %1, %3 : vector<8x32xf32>
    %c0_4 = arith.constant 0 : index
    %c0_5 = arith.constant 0 : index
    %5 = vector.load %arg3[%c0_4, %c0_5] : memref<1x32xf32, #tpu.memory_space<vmem>>, vector<1x32xf32>
    %6 = vector.broadcast %5 : vector<1x32xf32> to vector<8x32xf32>
    %7 = arith.addf %4, %6 : vector<8x32xf32>
    %c0_6 = arith.constant 0 : index
    %c0_7 = arith.constant 0 : index
    %8 = vector.load %arg5[%c0_6, %c0_7] : memref<8x32xf32, #tpu.memory_space<vmem>>, vector<8x32xf32>
    tpu.vector_store %arg5[%c0_6, %c0_7], %7 {strides = array<i32>} : memref<8x32xf32, #tpu.memory_space<vmem>>, vector<8x32xf32>,
    %c0_8 = arith.constant 0 : index
    %c0_9 = arith.constant 0 : index
    %9 = vector.load %arg5[%c0_8, %c0_9] : memref<8x32xf32, #tpu.memory_space<vmem>>, vector<8x32xf32>
    %c0_10 = arith.constant 0 : index
    %c1 = arith.constant 1 : index
    %c0_11 = arith.constant 0 : index
    %10 = vector.load %arg1[%c0_10, %c1, %c0_11] : memref<8x4x32xf32, #tpu.memory_space<vmem>>, vector<8x1x32xf32>
    %11 = vector.shape_cast %10 : vector<8x1x32xf32> to vector<8x32xf32>
    %c0_12 = arith.constant 0 : index
    %c1_13 = arith.constant 1 : index
    %12 = memref.load %arg2[%c0_12, %c1_13] : memref<1x4xf32, #tpu.memory_space<smem>>
    %13 = vector.broadcast %12 : f32 to vector<8x32xf32>
    %14 = arith.mulf %11, %13 : vector<8x32xf32>
    %15 = arith.addf %9, %14 : vector<8x32xf32>
    %c0_14 = arith.constant 0 : index
    %c0_15 = arith.constant 0 : index
    %16 = vector.load %arg5[%c0_14, %c0_15] : memref<8x32xf32, #tpu.memory_space<vmem>>, vector<8x32xf32>
    tpu.vector_store %arg5[%c0_14, %c0_15], %15 {strides = array<i32>} : memref<8x32xf32, #tpu.memory_space<vmem>>, vector<8x32xf32>,
    %c0_16 = arith.constant 0 : index
    %c0_17 = arith.constant 0 : index
    %17 = vector.load %arg5[%c0_16, %c0_17] : memref<8x32xf32, #tpu.memory_space<vmem>>, vector<8x32xf32>
    %c0_18 = arith.constant 0 : index
    %c2 = arith.constant 2 : index
    %c0_19 = arith.constant 0 : index
    %18 = vector.load %arg1[%c0_18, %c2, %c0_19] : memref<8x4x32xf32, #tpu.memory_space<vmem>>, vector<8x1x32xf32>
    %19 = vector.shape_cast %18 : vector<8x1x32xf32> to vector<8x32xf32>
    %c0_20 = arith.constant 0 : index
    %c2_21 = arith.constant 2 : index
    %20 = memref.load %arg2[%c0_20, %c2_21] : memref<1x4xf32, #tpu.memory_space<smem>>
    %21 = vector.broadcast %20 : f32 to vector<8x32xf32>
    %22 = arith.mulf %19, %21 : vector<8x32xf32>
    %23 = arith.addf %17, %22 : vector<8x32xf32>
    %c0_22 = arith.constant 0 : index
    %c0_23 = arith.constant 0 : index
    %24 = vector.load %arg5[%c0_22, %c0_23] : memref<8x32xf32, #tpu.memory_space<vmem>>, vector<8x32xf32>
    tpu.vector_store %arg5[%c0_22, %c0_23], %23 {strides = array<i32>} : memref<8x32xf32, #tpu.memory_space<vmem>>, vector<8x32xf32>,
    %c0_24 = arith.constant 0 : index
    %c0_25 = arith.constant 0 : index
    %25 = vector.load %arg5[%c0_24, %c0_25] : memref<8x32xf32, #tpu.memory_space<vmem>>, vector<8x32xf32>
    %c0_26 = arith.constant 0 : index
    %c3 = arith.constant 3 : index
    %c0_27 = arith.constant 0 : index
    %26 = vector.load %arg1[%c0_26, %c3, %c0_27] : memref<8x4x32xf32, #tpu.memory_space<vmem>>, vector<8x1x32xf32>
    %27 = vector.shape_cast %26 : vector<8x1x32xf32> to vector<8x32xf32>
    %c0_28 = arith.constant 0 : index
    %c3_29 = arith.constant 3 : index
    %28 = memref.load %arg2[%c0_28, %c3_29] : memref<1x4xf32, #tpu.memory_space<smem>>
    %29 = vector.broadcast %28 : f32 to vector<8x32xf32>
    %30 = arith.mulf %27, %29 : vector<8x32xf32>
    %31 = arith.addf %25, %30 : vector<8x32xf32>
    %c0_30 = arith.constant 0 : index
    %c0_31 = arith.constant 0 : index
    %32 = vector.load %arg5[%c0_30, %c0_31] : memref<8x32xf32, #tpu.memory_space<vmem>>, vector<8x32xf32>
    tpu.vector_store %arg5[%c0_30, %c0_31], %31 {strides = array<i32>} : memref<8x32xf32, #tpu.memory_space<vmem>>, vector<8x32xf32>,
    %c0_32 = arith.constant 0 : index
    %c0_33 = arith.constant 0 : index
    %33 = vector.load %arg5[%c0_32, %c0_33] : memref<8x32xf32, #tpu.memory_space<vmem>>, vector<8x32xf32>
    %c0_34 = arith.constant 0 : index
    %c0_35 = arith.constant 0 : index
    %34 = vector.load %arg4[%c0_34, %c0_35] : memref<8x32xf32, #tpu.memory_space<vmem>>, vector<8x32xf32>
    tpu.vector_store %arg4[%c0_34, %c0_35], %33 {strides = array<i32>} : memref<8x32xf32, #tpu.memory_space<vmem>>, vector<8x32xf32>,
    return
  }
  func.func @transform_0(%arg0: i32) -> (i32, i32, i32) {
    %c0_i32 = arith.constant 0 : i32
    %c0_i32_0 = arith.constant 0 : i32
    %c0_i32_1 = arith.constant 0 : i32
    return %arg0, %c0_i32, %c0_i32_0 : i32, i32, i32
  }
  func.func @transform_1(%arg0: i32) -> (i32, i32) {
    %c0_i32 = arith.constant 0 : i32
    %c0_i32_0 = arith.constant 0 : i32
    %c0_i32_1 = arith.constant 0 : i32
    return %c0_i32, %c0_i32_0 : i32, i32
  }
  func.func @transform_2(%arg0: i32) -> (i32, i32) {
    %c0_i32 = arith.constant 0 : i32
    %c0_i32_0 = arith.constant 0 : i32
    %c0_i32_1 = arith.constant 0 : i32
    return %c0_i32, %c0_i32_0 : i32, i32
  }
  func.func @transform_3(%arg0: i32) -> (i32, i32) {
    %c0_i32 = arith.constant 0 : i32
    %c0_i32_0 = arith.constant 0 : i32
    return %arg0, %c0_i32 : i32, i32
  }
}

</mosaic_0001>

<llo_original>
// kernel: tpu_custom_call.1
$region0: #{tpu_custom_call.1}
  #allocation0 [shape = 'u32[]', space=smem, size = 0x4, offset = 0x4, fixed_abs, tag = 'smem constant byte address 0x4 - core index']
  #allocation1 [shape = 'u32[144,128]{1,0:T(1,128)}', space=vmem, size = 0x12000, scoped, tag = 'internal scratch']
  #allocation2 [shape = 'f32[8,32]{1,0:T(8,128)}', space=vmem, size = 0x1000, scoped, tag = 'scratch operand']
  %s0 = inlined_call_operand.hbm [shape: f32[8,4,32], index: 0, kind: input, shape index: {}]
  %s1 = inlined_call_operand.vmem [shape: f32[1,4], index: 1, kind: input, shape index: {}]
  %s2 = inlined_call_operand.vmem [shape: f32[1,32], index: 2, kind: input, shape index: {}]
  %s3 = inlined_call_operand.hbm [shape: f32[8,32], index: 3, kind: output, shape index: {}]
  %s4 = sld [smem:[#allocation0]]
  $region30: #{tpu_custom_call.1} parent=0
    _
  %s6 = ssub.s32 1, %s4
  %s7 = scalar_select 0, %s6, %s4
  $region1: #{tpu_custom_call.1} parent=0
    #allocation3 [shape = 'u8[16384]{0}', space=vmem, size = 0x4000, scoped, tag = 'input window, operand 0, single buffered']
    #allocation4 [shape = 's32[1]{0}', space=sflag, size = 0x4, scoped, tag = 'scoped memory for tpu_custom_call.1']
    #allocation5 [shape = 's32[1]{0}', space=sflag, size = 0x4, scoped, tag = 'scoped memory for tpu_custom_call.1']
    #allocation6 [shape = 's32[1]{0}', space=sflag, size = 0x4, scoped, tag = 'scoped memory for tpu_custom_call.1']
    #allocation7 [shape = 'u8[512]{0}', space=smem, size = 0x200, scoped, tag = 'input window, operand 1, single buffered']
    #allocation8 [shape = 'u8[4096]{0}', space=vmem, size = 0x1000, scoped, tag = 'output window, operand 0, single buffered']
    %8 = vsyncpa [#allocation4], 0
    %9 = vsyncpa [#allocation6], 0
    %10 = vsyncpa [#allocation5], 0
    // Predicated region
    $region2: #{tpu_custom_call.1} parent=1 // pred_check
      _
    $region3: #{tpu_custom_call.1} parent=1 // pred_check_branch
      %12 = sbr.rel (0) target = $region5
    $region4: #{tpu_custom_call.1} parent=1 // pred_region
      %s14 = ssub.s32 512, 512
      %15 = vsyncadd [#allocation4], %s14
      %s16 = sshll.u32 [#allocation3], 4
      %s17 = int_to_ptr.vmem [resolvable:$true] %s16
      %22 = dma.hbm_to_vmem [thread:$0]  %s0, 512, %s17, [#allocation4], 64, 64, 4
    $region5: #{tpu_custom_call.1} parent=1 // pred_fallthru
      _
    // Predicated region
    $region6: #{tpu_custom_call.1} parent=1 // pred_check
      _
    $region7: #{tpu_custom_call.1} parent=1 // pred_check_branch
      %24 = sbr.rel (0) target = $region9
    $region8: #{tpu_custom_call.1} parent=1 // pred_region
      %s26 = ssub.s32 16, 16
      %27 = vsyncadd [#allocation6], %s26
      %s29 = sshll.u32 %s1, 4
      %s30 = int_to_ptr.vmem [resolvable:$true] %s29
      %32 = dma.vmem_to_smem %s30, 16, [#allocation7], [#allocation6]
    $region9: #{tpu_custom_call.1} parent=1 // pred_fallthru
      _
    // Predicated region
    $region10: #{tpu_custom_call.1} parent=1 // pred_check
      _
    $region11: #{tpu_custom_call.1} parent=1 // pred_check_branch
      %34 = sbr.rel (0) target = $region13
    $region12: #{tpu_custom_call.1} parent=1 // pred_region
      _
    $region13: #{tpu_custom_call.1} parent=1 // pred_fallthru
      _
    // Predicated region
    $region14: #{tpu_custom_call.1} parent=1 // pred_check
      _
    $region15: #{tpu_custom_call.1} parent=1 // pred_check_branch
      %36 = sbr.rel (0) target = $region17
    $region16: #{tpu_custom_call.1} parent=1 // pred_region
      %37 = dma.done [#allocation4], 512
    $region17: #{tpu_custom_call.1} parent=1 // pred_fallthru
      _
    // Predicated region
    $region18: #{tpu_custom_call.1} parent=1 // pred_check
      _
    $region19: #{tpu_custom_call.1} parent=1 // pred_check_branch
      %39 = sbr.rel (0) target = $region21
    $region20: #{tpu_custom_call.1} parent=1 // pred_region
      %40 = dma.done [#allocation6], 16
    $region21: #{tpu_custom_call.1} parent=1 // pred_fallthru
      _
    %41 = sfence
    %v42 = vld [vmem:[#allocation3] sm:$0x1]
    %v43 = vld [vmem:[#allocation3 + $0x4] sm:$0x1]
    %v44 = vld [vmem:[#allocation3 + $0x8] sm:$0x1]
    %v45 = vld [vmem:[#allocation3 + $0xc] sm:$0x1]
    %v46 = vld [vmem:[#allocation3 + $0x10] sm:$0x1]
    %v47 = vld [vmem:[#allocation3 + $0x14] sm:$0x1]
    %v48 = vld [vmem:[#allocation3 + $0x18] sm:$0x1]
    %v49 = vld [vmem:[#allocation3 + $0x1c] sm:$0x1]
    %s50 = sld [smem:[#allocation7]]
    %v51 = vstv %s50
    %v52 = vmul.f32 %v42, %v51
    %v53 = vmul.f32 %v43, %v51
    %v54 = vmul.f32 %v44, %v51
    %v55 = vmul.f32 %v45, %v51
    %v56 = vmul.f32 %v46, %v51
    %v57 = vmul.f32 %v47, %v51
    %v58 = vmul.f32 %v48, %v51
    %v59 = vmul.f32 %v49, %v51
    %v60 = vld [vmem:[%s2] sm:$0x1]
    %v62 = vlaneseq
    %v63 = vshrl.u32 %v62, 7
    %v64 = vsub.s32 0, %v63
    %v65 = vrot.slane %v60, %v64
    %v67 = vadd.f32 %v52, %v65
    %v68 = vadd.f32 %v53, %v65
    %v69 = vadd.f32 %v54, %v65
    %v70 = vadd.f32 %v55, %v65
    %v71 = vadd.f32 %v56, %v65
    %v72 = vadd.f32 %v57, %v65
    %v73 = vadd.f32 %v58, %v65
    %v74 = vadd.f32 %v59, %v65
    %v83 = vrot.slane %v68, 7
    %vm84 = vcmask 1041409
    %v85 = vsel %vm84, %v83, %v67
    %v86 = vrot.slane %v69, 6
    %vm87 = vcmask 1042434
    %v88 = vsel %vm87, %v86, %v85
    %v89 = vrot.slane %v70, 5
    %vm90 = vcmask 1043459
    %v91 = vsel %vm90, %v89, %v88
    %v92 = vrot.slane %v71, 4
    %vm93 = vcmask 1044484
    %v94 = vsel %vm93, %v92, %v91
    %v95 = vrot.slane %v72, 3
    %vm96 = vcmask 1045509
    %v97 = vsel %vm96, %v95, %v94
    %v98 = vrot.slane %v73, 2
    %vm99 = vcmask 1046534
    %v100 = vsel %vm99, %v98, %v97
    %v101 = vrot.slane %v74, 1
    %vm102 = vcmask 1047559
    %v103 = vsel %vm102, %v101, %v100
    %vm105 = vcmask 261120
    %106 = vst.msk [vmem:[#allocation2] sm:$0xff] %vm105, %v103
    %v107 = vld [vmem:[#allocation2] sm:$0xff]
    %v108 = vld [vmem:[#allocation3 + $0x1] sm:$0x1]
    %v109 = vld [vmem:[#allocation3 + $0x5] sm:$0x1]
    %v110 = vld [vmem:[#allocation3 + $0x9] sm:$0x1]
    %v111 = vld [vmem:[#allocation3 + $0xd] sm:$0x1]
    %v112 = vld [vmem:[#allocation3 + $0x11] sm:$0x1]
    %v113 = vld [vmem:[#allocation3 + $0x15] sm:$0x1]
    %v114 = vld [vmem:[#allocation3 + $0x19] sm:$0x1]
    %v115 = vld [vmem:[#allocation3 + $0x1d] sm:$0x1]
    %s116 = sld [smem:[#allocation7 + $0x1]]
    %v117 = vstv %s116
    %v118 = vmul.f32 %v108, %v117
    %v119 = vmul.f32 %v109, %v117
    %v120 = vmul.f32 %v110, %v117
    %v121 = vmul.f32 %v111, %v117
    %v122 = vmul.f32 %v112, %v117
    %v123 = vmul.f32 %v113, %v117
    %v124 = vmul.f32 %v114, %v117
    %v125 = vmul.f32 %v115, %v117
    %v134 = vrot.slane %v119, 7
    %v135 = vsel %vm84, %v134, %v118
    %v136 = vrot.slane %v120, 6
    %v137 = vsel %vm87, %v136, %v135
    %v138 = vrot.slane %v121, 5
    %v139 = vsel %vm90, %v138, %v137
    %v140 = vrot.slane %v122, 4
    %v141 = vsel %vm93, %v140, %v139
    %v142 = vrot.slane %v123, 3
    %v143 = vsel %vm96, %v142, %v141
    %v144 = vrot.slane %v124, 2
    %v145 = vsel %vm99, %v144, %v143
    %v146 = vrot.slane %v125, 1
    %v147 = vsel %vm102, %v146, %v145
    %v149 = vadd.f32 %v107, %v147
    %150 = vst.msk [vmem:[#allocation2] sm:$0xff] %vm105, %v149
    %v151 = vld [vmem:[#allocation2] sm:$0xff]
    %v152 = vld [vmem:[#allocation3 + $0x2] sm:$0x1]
    %v153 = vld [vmem:[#allocation3 + $0x6] sm:$0x1]
    %v154 = vld [vmem:[#allocation3 + $0xa] sm:$0x1]
    %v155 = vld [vmem:[#allocation3 + $0xe] sm:$0x1]
    %v156 = vld [vmem:[#allocation3 + $0x12] sm:$0x1]
    %v157 = vld [vmem:[#allocation3 + $0x16] sm:$0x1]
    %v158 = vld [vmem:[#allocation3 + $0x1a] sm:$0x1]
    %v159 = vld [vmem:[#allocation3 + $0x1e] sm:$0x1]
    %s160 = sld [smem:[#allocation7 + $0x2]]
    %v161 = vstv %s160
    %v162 = vmul.f32 %v152, %v161
    %v163 = vmul.f32 %v153, %v161
    %v164 = vmul.f32 %v154, %v161
    %v165 = vmul.f32 %v155, %v161
    %v166 = vmul.f32 %v156, %v161
    %v167 = vmul.f32 %v157, %v161
    %v168 = vmul.f32 %v158, %v161
    %v169 = vmul.f32 %v159, %v161
    %v178 = vrot.slane %v163, 7
    %v179 = vsel %vm84, %v178, %v162
    %v180 = vrot.slane %v164, 6
    %v181 = vsel %vm87, %v180, %v179
    %v182 = vrot.slane %v165, 5
    %v183 = vsel %vm90, %v182, %v181
    %v184 = vrot.slane %v166, 4
    %v185 = vsel %vm93, %v184, %v183
    %v186 = vrot.slane %v167, 3
    %v187 = vsel %vm96, %v186, %v185
    %v188 = vrot.slane %v168, 2
    %v189 = vsel %vm99, %v188, %v187
    %v190 = vrot.slane %v169, 1
    %v191 = vsel %vm102, %v190, %v189
    %v193 = vadd.f32 %v151, %v191
    %194 = vst.msk [vmem:[#allocation2] sm:$0xff] %vm105, %v193
    %v195 = vld [vmem:[#allocation2] sm:$0xff]
    %v196 = vld [vmem:[#allocation3 + $0x3] sm:$0x1]
    %v197 = vld [vmem:[#allocation3 + $0x7] sm:$0x1]
    %v198 = vld [vmem:[#allocation3 + $0xb] sm:$0x1]
    %v199 = vld [vmem:[#allocation3 + $0xf] sm:$0x1]
    %v200 = vld [vmem:[#allocation3 + $0x13] sm:$0x1]
    %v201 = vld [vmem:[#allocation3 + $0x17] sm:$0x1]
    %v202 = vld [vmem:[#allocation3 + $0x1b] sm:$0x1]
    %v203 = vld [vmem:[#allocation3 + $0x1f] sm:$0x1]
    %s204 = sld [smem:[#allocation7 + $0x3]]
    %v205 = vstv %s204
    %v206 = vmul.f32 %v196, %v205
    %v207 = vmul.f32 %v197, %v205
    %v208 = vmul.f32 %v198, %v205
    %v209 = vmul.f32 %v199, %v205
    %v210 = vmul.f32 %v200, %v205
    %v211 = vmul.f32 %v201, %v205
    %v212 = vmul.f32 %v202, %v205
    %v213 = vmul.f32 %v203, %v205
    %v222 = vrot.slane %v207, 7
    %v223 = vsel %vm84, %v222, %v206
    %v224 = vrot.slane %v208, 6
    %v225 = vsel %vm87, %v224, %v223
    %v226 = vrot.slane %v209, 5
    %v227 = vsel %vm90, %v226, %v225
    %v228 = vrot.slane %v210, 4
    %v229 = vsel %vm93, %v228, %v227
    %v230 = vrot.slane %v211, 3
    %v231 = vsel %vm96, %v230, %v229
    %v232 = vrot.slane %v212, 2
    %v233 = vsel %vm99, %v232, %v231
    %v234 = vrot.slane %v213, 1
    %v235 = vsel %vm102, %v234, %v233
    %v237 = vadd.f32 %v195, %v235
    %238 = vst.msk [vmem:[#allocation2] sm:$0xff] %vm105, %v237
    %v239 = vld [vmem:[#allocation2] sm:$0xff]
    %240 = vst.msk [vmem:[#allocation8] sm:$0xff] %vm105, %v239
    // Predicated region
    $region22: #{tpu_custom_call.1} parent=1 // pred_check
      _
    $region23: #{tpu_custom_call.1} parent=1 // pred_check_branch
      %242 = sbr.rel (0) target = $region25
    $region24: #{tpu_custom_call.1} parent=1 // pred_region
      %s244 = ssub.s32 128, 128
      %245 = vsyncadd [#allocation5], %s244
      %s247 = sshll.u32 [#allocation8], 4
      %s248 = int_to_ptr.vmem [resolvable:$true] %s247
      %250 = dma.vmem_to_hbm [thread:$0]  %s248, 128, %s3, [#allocation5]
    $region25: #{tpu_custom_call.1} parent=1 // pred_fallthru
      _
    // Predicated region
    $region26: #{tpu_custom_call.1} parent=1 // pred_check
      _
    $region27: #{tpu_custom_call.1} parent=1 // pred_check_branch
      %252 = sbr.rel (0) target = $region29
    $region28: #{tpu_custom_call.1} parent=1 // pred_region
      %253 = dma.done [#allocation5], 128
    $region29: #{tpu_custom_call.1} parent=1 // pred_fallthru
      _
    %254 = vsyncpa [#allocation4], 1
    %255 = vsyncpa [#allocation5], 1
    %256 = vsyncpa [#allocation6], 1

</llo_original>
